<compile_context>
chip_gen: v5e
topology: v5e:2x2
jax: 0.10.0
libtpu: 0.0.40
codegen_flags: <defaults>
</compile_context>

<pallas_src>
import functools

import jax
import jax.numpy as jnp
from jax.experimental import pallas as pl
from jax.experimental.pallas import tpu as pltpu


def _round_up(n: int, m: int) -> int:
    return ((n + m - 1) // m) * m


def classifier_kernel(x_ref, w1_ref, b1_ref, w2_ref, b2_ref, o_ref):
    x = x_ref[...]                                                   # (TB, 10) f32
    # Linear(10, 5) + ReLU.  K=10 is tiny; compute is negligible / mem-bound.
    h = jnp.dot(x, w1_ref[...], preferred_element_type=jnp.float32) + b1_ref[...]
    h = jnp.maximum(h, 0.0)
    # Linear(5, 2)
    logits = jnp.dot(h, w2_ref[...], preferred_element_type=jnp.float32) + b2_ref[...]
    # 2-class softmax as elementwise sigmoid (no XLU reductions):
    #   p1 = e^{l1} / (e^{l0} + e^{l1}) = sigmoid(l1 - l0);  p0 = 1 - p1.
    l0 = logits[:, 0:1]
    l1 = logits[:, 1:2]
    p1 = jax.nn.sigmoid(l1 - l0)                                     # (TB, 1)
    col = jax.lax.broadcasted_iota(jnp.int32, logits.shape, 1)       # (TB, 2)
    o_ref[...] = jnp.where(col == 1, p1, 1.0 - p1)


@functools.partial(jax.jit, static_argnames=("block_rows",))
def classifier_forward(x, w1, b1, w2, b2, *, block_rows=1024):
    B, F = x.shape
    assert F == 10, "Classifier expects 10 input features"

    # Row tile: multiple of 8 (f32 sublane), capped at block_rows, no larger
    # than the (row-padded) batch itself.
    tb = _round_up(min(block_rows, _round_up(B, 8)), 8)
    b_pad = _round_up(B, tb)
    if b_pad != B:
        x = jnp.pad(x, ((0, b_pad - B), (0, 0)))

    grid = (b_pad // tb,)

    out = pl.pallas_call(
        classifier_kernel,
        out_shape=jax.ShapeDtypeStruct((b_pad, 2), jnp.float32),
        grid=grid,
        in_specs=[
            pl.BlockSpec((tb, 10), lambda i: (i, 0)),   # x: blocked over batch
            pl.BlockSpec((10, 5), lambda i: (0, 0)),    # w1: resident
            pl.BlockSpec((1, 5), lambda i: (0, 0)),     # b1: resident
            pl.BlockSpec((5, 2), lambda i: (0, 0)),     # w2: resident
            pl.BlockSpec((1, 2), lambda i: (0, 0)),     # b2: resident
        ],
        out_specs=pl.BlockSpec((tb, 2), lambda i: (i, 0)),
        compiler_params=pltpu.CompilerParams(
            dimension_semantics=("parallel",),          # megacore sharding on v7x
        ),
    )(x, w1, b1, w2, b2)

    if b_pad != B:
        out = out[:B]
    return out


def init_params(key):
    """Deterministic init mirroring nn.Linear default (uniform +-1/sqrt(fan_in))."""
    k1, k2, k3, k4 = jax.random.split(key, 4)
    bound1 = 1.0 / jnp.sqrt(10.0)
    bound2 = 1.0 / jnp.sqrt(5.0)
    # Stored as (in, out); torch stores (out, in) -- forward math is identical.
    w1 = jax.random.uniform(k1, (10, 5), jnp.float32, -bound1, bound1)
    b1 = jax.random.uniform(k2, (1, 5), jnp.float32, -bound1, bound1)
    w2 = jax.random.uniform(k3, (5, 2), jnp.float32, -bound2, bound2)
    b2 = jax.random.uniform(k4, (1, 2), jnp.float32, -bound2, bound2)
    return w1, b1, w2, b2


def _reference(x, w1, b1, w2, b2):
    h = jnp.maximum(x @ w1 + b1, 0.0)
    return jax.nn.softmax(h @ w2 + b2, axis=1)


if __name__ == "__main__":
    key = jax.random.PRNGKey(0)
    kx, kp, kx2 = jax.random.split(key, 3)

    w1, b1, w2, b2 = init_params(kp)

    # Small batch (module-native shape): (8, 10) -> (8, 2).
    B = 8
    x = jax.random.normal(kx, (B, 10), jnp.float32)
    out = jax.block_until_ready(classifier_forward(x, w1, b1, w2, b2))
    ref = _reference(x, w1, b1, w2, b2)
    assert out.shape == (B, 2)
    assert jnp.allclose(out, ref, atol=1e-5), "mismatch vs reference (B=8)"
    assert jnp.allclose(jnp.sum(out, axis=1), 1.0, atol=1e-5)

    # Larger, non-multiple batch to exercise the blocked grid + tail padding.
    B2 = 300
    x2 = jax.random.normal(kx2, (B2, 10), jnp.float32)
    out2 = jax.block_until_ready(
        classifier_forward(x2, w1, b1, w2, b2, block_rows=128))
    ref2 = _reference(x2, w1, b1, w2, b2)
    assert out2.shape == (B2, 2)
    assert jnp.allclose(out2, ref2, atol=1e-5), "mismatch vs reference (B=300)"
    assert jnp.allclose(jnp.sum(out2, axis=1), 1.0, atol=1e-5)

    print("KERNEL_OK")
</pallas_src>

<mosaic_0001>
module attributes {stable_mosaic.version = 11 : i64} {
  func.func @classifier_kernel(%arg0: i32, %arg1: memref<8x10xf32, #tpu.memory_space<vmem>>, %arg2: memref<10x5xf32, #tpu.memory_space<vmem>>, %arg3: memref<1x5xf32, #tpu.memory_space<vmem>>, %arg4: memref<5x2xf32, #tpu.memory_space<vmem>>, %arg5: memref<1x2xf32, #tpu.memory_space<vmem>>, %arg6: memref<8x2xf32, #tpu.memory_space<vmem>>) attributes {dimension_semantics = [#tpu.dimension_semantics<parallel>], iteration_bounds = array<i64: 1>, scalar_prefetch = 0 : i64, scratch_operands = 0 : i64, tpu.core_type = #tpu.core_type<tc>, window_params = [{transform_indices = @transform_0, window_bounds = array<i64: 8, 10>}, {pipeline_mode = #tpu.pipeline_mode<synchronous>, transform_indices = @transform_1, window_bounds = array<i64: 10, 5>}, {pipeline_mode = #tpu.pipeline_mode<synchronous>, transform_indices = @transform_2, window_bounds = array<i64: 1, 5>}, {pipeline_mode = #tpu.pipeline_mode<synchronous>, transform_indices = @transform_3, window_bounds = array<i64: 5, 2>}, {pipeline_mode = #tpu.pipeline_mode<synchronous>, transform_indices = @transform_4, window_bounds = array<i64: 1, 2>}, {transform_indices = @transform_5, window_bounds = array<i64: 8, 2>}]} {
    %c0 = arith.constant 0 : index
    %c0_0 = arith.constant 0 : index
    %0 = vector.load %arg1[%c0, %c0_0] : memref<8x10xf32, #tpu.memory_space<vmem>>, vector<8x10xf32>
    %c0_1 = arith.constant 0 : index
    %c0_2 = arith.constant 0 : index
    %1 = vector.load %arg2[%c0_1, %c0_2] : memref<10x5xf32, #tpu.memory_space<vmem>>, vector<10x5xf32>
    %cst = arith.constant dense<0.000000e+00> : vector<8x5xf32>
    %2 = tpu.matmul %0, %1, %cst {dimension_numbers = #tpu.dot_dimension_numbers<[1], [0], [0], [1], [0, 0, 1, 1], [], []>} : vector<8x10xf32>, vector<10x5xf32>, vector<8x5xf32> -> vector<8x5xf32>
    %c0_3 = arith.constant 0 : index
    %c0_4 = arith.constant 0 : index
    %3 = vector.load %arg3[%c0_3, %c0_4] : memref<1x5xf32, #tpu.memory_space<vmem>>, vector<1x5xf32>
    %4 = vector.broadcast %3 : vector<1x5xf32> to vector<8x5xf32>
    %5 = arith.addf %2, %4 : vector<8x5xf32>
    %cst_5 = arith.constant 0.000000e+00 : f32
    %6 = vector.broadcast %cst_5 : f32 to vector<8x5xf32>
    %7 = arith.maximumf %5, %6 : vector<8x5xf32>
    %c0_6 = arith.constant 0 : index
    %c0_7 = arith.constant 0 : index
    %8 = vector.load %arg4[%c0_6, %c0_7] : memref<5x2xf32, #tpu.memory_space<vmem>>, vector<5x2xf32>
    %cst_8 = arith.constant dense<0.000000e+00> : vector<8x2xf32>
    %9 = tpu.matmul %7, %8, %cst_8 {dimension_numbers = #tpu.dot_dimension_numbers<[1], [0], [0], [1], [0, 0, 1, 1], [], []>} : vector<8x5xf32>, vector<5x2xf32>, vector<8x2xf32> -> vector<8x2xf32>
    %c0_9 = arith.constant 0 : index
    %c0_10 = arith.constant 0 : index
    %10 = vector.load %arg5[%c0_9, %c0_10] : memref<1x2xf32, #tpu.memory_space<vmem>>, vector<1x2xf32>
    %11 = vector.broadcast %10 : vector<1x2xf32> to vector<8x2xf32>
    %12 = arith.addf %9, %11 : vector<8x2xf32>
    %13 = vector.extract_strided_slice %12 {offsets = [0, 0], sizes = [8, 1], strides = [1, 1]} : vector<8x2xf32> to vector<8x1xf32>
    %14 = vector.extract_strided_slice %12 {offsets = [0, 1], sizes = [8, 1], strides = [1, 1]} : vector<8x2xf32> to vector<8x1xf32>
    %15 = arith.subf %14, %13 : vector<8x1xf32>
    %16 = arith.negf %15 : vector<8x1xf32>
    %17 = math.exp %16 : vector<8x1xf32>
    %cst_11 = arith.constant 1.000000e+00 : f32
    %18 = vector.broadcast %cst_11 : f32 to vector<8x1xf32>
    %19 = arith.addf %18, %17 : vector<8x1xf32>
    %20 = arith.divf %18, %19 : vector<8x1xf32>
    %21 = tpu.iota {dimensions = array<i32: 1>} : vector<8x2xi32>
    %c1_i32 = arith.constant 1 : i32
    %22 = vector.broadcast %c1_i32 : i32 to vector<8x2xi32>
    %23 = arith.cmpi eq, %21, %22 : vector<8x2xi32>
    %cst_12 = arith.constant 1.000000e+00 : f32
    %24 = vector.broadcast %cst_12 : f32 to vector<8x1xf32>
    %25 = arith.subf %24, %20 : vector<8x1xf32>
    %26 = vector.shape_cast %20 : vector<8x1xf32> to vector<8x1xf32>
    %27 = vector.broadcast %26 : vector<8x1xf32> to vector<8x2xf32>
    %28 = vector.shape_cast %25 : vector<8x1xf32> to vector<8x1xf32>
    %29 = vector.broadcast %28 : vector<8x1xf32> to vector<8x2xf32>
    %30 = arith.select %23, %27, %29 : vector<8x2xi1>, vector<8x2xf32>
    %c0_13 = arith.constant 0 : index
    %c0_14 = arith.constant 0 : index
    %31 = vector.load %arg6[%c0_13, %c0_14] : memref<8x2xf32, #tpu.memory_space<vmem>>, vector<8x2xf32>
    tpu.vector_store %arg6[%c0_13, %c0_14], %30 {strides = array<i32>} : memref<8x2xf32, #tpu.memory_space<vmem>>, vector<8x2xf32>,
    return
  }
  func.func @transform_0(%arg0: i32) -> (i32, i32) {
    %c0_i32 = arith.constant 0 : i32
    %c0_i32_0 = arith.constant 0 : i32
    return %arg0, %c0_i32 : i32, i32
  }
  func.func @transform_1(%arg0: i32) -> (i32, i32) {
    %c0_i32 = arith.constant 0 : i32
    %c0_i32_0 = arith.constant 0 : i32
    %c0_i32_1 = arith.constant 0 : i32
    return %c0_i32, %c0_i32_0 : i32, i32
  }
  func.func @transform_2(%arg0: i32) -> (i32, i32) {
    %c0_i32 = arith.constant 0 : i32
    %c0_i32_0 = arith.constant 0 : i32
    %c0_i32_1 = arith.constant 0 : i32
    return %c0_i32, %c0_i32_0 : i32, i32
  }
  func.func @transform_3(%arg0: i32) -> (i32, i32) {
    %c0_i32 = arith.constant 0 : i32
    %c0_i32_0 = arith.constant 0 : i32
    %c0_i32_1 = arith.constant 0 : i32
    return %c0_i32, %c0_i32_0 : i32, i32
  }
  func.func @transform_4(%arg0: i32) -> (i32, i32) {
    %c0_i32 = arith.constant 0 : i32
    %c0_i32_0 = arith.constant 0 : i32
    %c0_i32_1 = arith.constant 0 : i32
    return %c0_i32, %c0_i32_0 : i32, i32
  }
  func.func @transform_5(%arg0: i32) -> (i32, i32) {
    %c0_i32 = arith.constant 0 : i32
    %c0_i32_0 = arith.constant 0 : i32
    return %arg0, %c0_i32 : i32, i32
  }
}

</mosaic_0001>

<llo_original>
// kernel: classifier_forward.1
$region0: #{classifier_forward.1}
  #allocation0 [shape = 'u32[]', space=smem, size = 0x4, offset = 0x4, fixed_abs, tag = 'smem constant byte address 0x4 - core index']
  #allocation1 [shape = 'u32[72,128]{1,0:T(1,128)}', space=vmem, size = 0x9000, scoped, tag = 'internal scratch']
  %s0 = inlined_call_operand.vmem [shape: f32[8,10], index: 0, kind: input, shape index: {}]
  %s1 = inlined_call_operand.vmem [shape: f32[10,5], index: 1, kind: input, shape index: {}]
  %s2 = inlined_call_operand.vmem [shape: f32[1,5], index: 2, kind: input, shape index: {}]
  %s3 = inlined_call_operand.vmem [shape: f32[5,2], index: 3, kind: input, shape index: {}]
  %s4 = inlined_call_operand.vmem [shape: f32[1,2], index: 4, kind: input, shape index: {}]
  %s5 = inlined_call_operand.vmem [shape: f32[8,2], index: 5, kind: output, shape index: {}]
  %s6 = sld [smem:[#allocation0]]
  $region30: #{classifier_forward.1} parent=0
    _
  %s8 = ssub.s32 1, %s6
  %s9 = scalar_select 0, %s8, %s6
  // Predicated region
  $region2: #{classifier_forward.1} parent=0 // pred_check
    _
  $region3: #{classifier_forward.1} parent=0 // pred_check_branch
    %11 = sbr.rel (0) target = $region5
  $region4: #{classifier_forward.1} parent=0 // pred_region
    _
  $region5: #{classifier_forward.1} parent=0 // pred_fallthru
    _
  // Predicated region
  $region6: #{classifier_forward.1} parent=0 // pred_check
    _
  $region7: #{classifier_forward.1} parent=0 // pred_check_branch
    %13 = sbr.rel (0) target = $region9
  $region8: #{classifier_forward.1} parent=0 // pred_region
    _
  $region9: #{classifier_forward.1} parent=0 // pred_fallthru
    _
  // Predicated region
  $region10: #{classifier_forward.1} parent=0 // pred_check
    _
  $region11: #{classifier_forward.1} parent=0 // pred_check_branch
    %15 = sbr.rel (0) target = $region13
  $region12: #{classifier_forward.1} parent=0 // pred_region
    _
  $region13: #{classifier_forward.1} parent=0 // pred_fallthru
    _
  // Predicated region
  $region14: #{classifier_forward.1} parent=0 // pred_check
    _
  $region15: #{classifier_forward.1} parent=0 // pred_check_branch
    %17 = sbr.rel (0) target = $region17
  $region16: #{classifier_forward.1} parent=0 // pred_region
    _
  $region17: #{classifier_forward.1} parent=0 // pred_fallthru
    _
  // Predicated region
  $region18: #{classifier_forward.1} parent=0 // pred_check
    _
  $region19: #{classifier_forward.1} parent=0 // pred_check_branch
    %19 = sbr.rel (0) target = $region21
  $region20: #{classifier_forward.1} parent=0 // pred_region
    _
  $region21: #{classifier_forward.1} parent=0 // pred_fallthru
    _
  %v20 = vld [vmem:[%s0] sm:$0xff]
  %v21 = vld [vmem:[%s1] sm:$0xff]
  %v22 = vld [vmem:[%s1 + $0x8] sm:$0x3]
  %v23 = vld [vmem:[%s2] sm:$0x1]
  %v25 = vperm.slane %v23, 0
  %vm27 = vcmask 80896
  %v29 = vsel %vm27, %v20, 0
  %vm31 = vcmask 1041408
  %v33 = vsel %vm31, %v22, 0
  %35 = vmatpush.msra.mxu0 0.0
  %36 = vmatpush.msra.mxu0 0.0
  %37 = vmatpush.msra.mxu0 0.0
  %38 = vmatpush.msra.mxu0 0.0
  %39 = vmatpush.msra.mxu0 0.0
  %40 = vmatpush.msra.mxu0 0.0
  %41 = vmatpush.msra.mxu0 0.0
  %42 = vmatpush.msra.mxu0 0.0
  %43 = vmatpush.msra.mxu0 0.0
  %44 = vmatpush.msra.mxu0 0.0
  %45 = vmatpush.msra.mxu0 0.0
  %46 = vmatpush.msra.mxu0 0.0
  %47 = vmatpush.msra.mxu0 0.0
  %48 = vmatpush.msra.mxu0 0.0
  %49 = vmatpush.msra.mxu0 %v33
  %50 = vmatpush.msra.mxu0 %v21
  %51 = vmatmul.f32.gmra.mxu0 %v29
  %v52 = vpop.f32.mrf.mxu0
  %v53 = vadd.f32 %v25, %v52
  %54 = vdwg.mxu0
  %v55 = vmax.f32 %v53, 0.0
  %v56 = vld [vmem:[%s3] sm:$0x1f]
  %v57 = vld [vmem:[%s4] sm:$0x1]
  %v59 = vperm.slane %v57, 0
  %vm61 = vcmask 39936
  %v63 = vsel %vm61, %v55, 0
  %vm65 = vcmask 1044480
  %v67 = vsel %vm65, %v56, 0
  %69 = vmatpush.msra.mxu0 0.0
  %70 = vmatpush.msra.mxu0 0.0
  %71 = vmatpush.msra.mxu0 0.0
  %72 = vmatpush.msra.mxu0 0.0
  %73 = vmatpush.msra.mxu0 0.0
  %74 = vmatpush.msra.mxu0 0.0
  %75 = vmatpush.msra.mxu0 0.0
  %76 = vmatpush.msra.mxu0 0.0
  %77 = vmatpush.msra.mxu0 0.0
  %78 = vmatpush.msra.mxu0 0.0
  %79 = vmatpush.msra.mxu0 0.0
  %80 = vmatpush.msra.mxu0 0.0
  %81 = vmatpush.msra.mxu0 0.0
  %82 = vmatpush.msra.mxu0 0.0
  %83 = vmatpush.msra.mxu0 0.0
  %84 = vmatpush.msra.mxu0 %v67
  %85 = vmatmul.f32.gmra.mxu0 %v63
  %v86 = vpop.f32.mrf.mxu0
  %v87 = vadd.f32 %v59, %v86
  %88 = vdwg.mxu0
  %90 = vrot.lane.b32.xlu0 %v87, 1
  %v91 = vpop.permute.xlu0 %90
  %v93 = vsub.f32 %v87, %v91
  %v94 = vxor.u32 %v93, 2147483648
  %v95 = vmul.f32 %v94, 1.442695
  %v96 = vpow.pop %v95
  %v97 = vadd.f32 %v96, 1.0
  %v98 = vrcp.pop %v97
  %v99 = vmul.f32 %v97, %v98
  %v100 = vsub.f32 1.0, %v99
  %v101 = vmul.f32 %v98, %v100
  %v102 = vadd.f32 %v98, %v101
  %vm103 = vweird.f32 %v97
  %vm104 = vweird.f32 %v98
  %vm105 = vmor %vm103, %vm104
  %v106 = vsel %vm105, %v98, %v102
  %v107 = vand.u32 2147483647, %v97
  %vm108 = vcmp.eq.f32.partialorder %v107, 8.507059e+37
  %v109 = vand.u32 %v97, 2147483648
  %v110 = vor.u32 1.1754944e-38, %v109
  %v111 = vsel %vm108, %v110, %v106
  %v112 = vmul.f32 1.0, %v111
  %v113 = vlaneseq
  %v114 = vand.u32 %v113, 127
  %vm115 = vcmp.eq.s32.totalorder %v114, 1
  %v116 = vsub.f32 1.0, %v112
  %118 = vset.pattern.permute.xlu0 1
  %119 = vperm.xlu0 %118, %v112
  %v120 = vpop.permute.xlu0 %119
  %123 = vset.pattern.permute.xlu0 1
  %124 = vperm.xlu0 %123, %v116
  %v125 = vpop.permute.xlu0 %124
  %v127 = vsel %vm115, %v120, %v125
  %vm128 = vcmask 15360
  %129 = vst.msk [vmem:[%s5] sm:$0xff] %vm128, %v127
  // Predicated region
  $region22: #{classifier_forward.1} parent=0 // pred_check
    _
  $region23: #{classifier_forward.1} parent=0 // pred_check_branch
    %131 = sbr.rel (0) target = $region25
  $region24: #{classifier_forward.1} parent=0 // pred_region
    _
  $region25: #{classifier_forward.1} parent=0 // pred_fallthru
    _
  // Predicated region
  $region26: #{classifier_forward.1} parent=0 // pred_check
    _
  $region27: #{classifier_forward.1} parent=0 // pred_check_branch
    %133 = sbr.rel (0) target = $region29
  $region28: #{classifier_forward.1} parent=0 // pred_region
    _
  $region29: #{classifier_forward.1} parent=0 // pred_fallthru
    _

</llo_original>
